<compile_context>
chip_gen: v7x
topology: tpu7x:2x2x1
jax: 0.10.0
libtpu: 0.0.40
codegen_flags: <defaults>
</compile_context>

<pallas_src>
import functools
from typing import Dict, List

import jax
import jax.numpy as jnp
from jax import lax
from jax.experimental import pallas as pl
from jax.experimental.pallas import tpu as pltpu


def _round_up(x: int, m: int) -> int:
    return ((x + m - 1) // m) * m


def _vmem_capacity_bytes() -> int:
    try:
        return int(pltpu.get_tpu_info().vmem_capacity_bytes)
    except Exception:
        return 64 << 20   # conservative fallback (v7x per-TC VMEM)


_VMEM_CAP = _vmem_capacity_bytes()


def _sublane(dtype) -> int:
    # min second-to-last tile dim: 8 (f32) / 16 (bf16) / 32 (int8, fp8)
    return max(8, 32 // jnp.dtype(dtype).itemsize)


# --------------------------------------------------------------------------
# Pallas kernels: one MXU matmul per (M-tile, N-tile) + small epilogue
# --------------------------------------------------------------------------
def _cos_kernel(x_ref, ct_ref, cstat_ref, o_ref):
    # x_ref:     (tm, D)   input tile, native dtype (f32 or bf16)
    # ct_ref:    (D, tn)   pre-transposed clusters
    # cstat_ref: (1, tn)   1 / (max(||c||, 1e-8) * temperature), f32
    x = x_ref[...]
    dots = jnp.dot(x, ct_ref[...], preferred_element_type=jnp.float32)   # MXU
    xf = x.astype(jnp.float32)
    x2 = jnp.sum(xf * xf, axis=-1, keepdims=True)                        # (tm, 1)
    inv_xnorm = lax.rsqrt(jnp.maximum(x2, jnp.float32(1e-16)))           # EUP, per-row
    o_ref[...] = (dots * inv_xnorm * cstat_ref[...]).astype(o_ref.dtype)


def _l2_kernel(x_ref, ct_ref, c2_ref, o_ref):
    # ct_ref holds -2 * c.T and c2_ref holds ||c||^2, so
    # d2 = ||x||^2 + ||c||^2 + (x . (-2 c)) = ||x - c||^2
    x = x_ref[...]
    dots = jnp.dot(x, ct_ref[...], preferred_element_type=jnp.float32)   # MXU
    xf = x.astype(jnp.float32)
    x2 = jnp.sum(xf * xf, axis=-1, keepdims=True)                        # (tm, 1)
    d2 = jnp.maximum(x2 + c2_ref[...] + dots, 0.0)
    o_ref[...] = (-jnp.sqrt(d2)).astype(o_ref.dtype)


# --------------------------------------------------------------------------
# pallas_call wrapper: (M, D) x (D, Npad) clusters -> (M, Npad)
# --------------------------------------------------------------------------
def _cluster_head_2d(x2d: jax.Array, ct: jax.Array, cstat: jax.Array, *,
                     mode: str) -> jax.Array:
    M, D = x2d.shape
    Dc, Npad = ct.shape
    assert D == Dc and cstat.shape == (1, Npad) and Npad % 128 == 0

    x_item = jnp.dtype(x2d.dtype).itemsize
    ct_item = jnp.dtype(ct.dtype).itemsize
    out_dtype = x2d.dtype                       # write output in input dtype
    out_item = jnp.dtype(out_dtype).itemsize
    sub = _sublane(x2d.dtype)

    budget = int(_VMEM_CAP * 0.6)               # headroom for compiler scratch

    # ---- N-tile: bound the (double-buffered) cluster block for large n_c
    tn = Npad
    while tn > 128 and 2 * D * tn * ct_item > budget // 3:
        tn = _round_up(max(128, tn // 2), 128)

    # ---- M-tile: as large as fits (amortize ~0.35us/step), incl. f32 temps
    def working_set(tm_: int) -> int:
        return (2 * tm_ * D * x_item            # x tile (double-buffered)
                + 2 * D * tn * ct_item          # cluster tile (double-buffered)
                + 2 * tn * 4                    # cluster stats
                + 2 * tm_ * tn * out_item       # output tile (double-buffered)
                + tm_ * tn * 4                  # f32 dots intermediate
                + tm_ * D * 4)                  # f32 x copy for the norm

    tm = 1024
    while tm > sub and working_set(tm) > budget:
        tm //= 2
    tm = _round_up(max(sub, min(tm, _round_up(M, sub))), sub)

    vmem_limit = int(min(_VMEM_CAP * 3 // 4,
                         max(32 << 20, 2 * working_set(tm) + (8 << 20))))

    grid = (pl.cdiv(M, tm), pl.cdiv(Npad, tn))
    kernel = _cos_kernel if mode == "cos" else _l2_kernel

    return pl.pallas_call(
        kernel,
        out_shape=jax.ShapeDtypeStruct((M, Npad), out_dtype),
        grid_spec=pltpu.PrefetchScalarGridSpec(
            num_scalar_prefetch=0,
            grid=grid,
            in_specs=[
                pl.BlockSpec((tm, D), lambda i, j: (i, 0)),   # x: resident over j
                pl.BlockSpec((D, tn), lambda i, j: (0, j)),   # clusters
                pl.BlockSpec((1, tn), lambda i, j: (0, j)),   # cluster stats
            ],
            out_specs=pl.BlockSpec((tm, tn), lambda i, j: (i, j)),
        ),
        compiler_params=pltpu.CompilerParams(
            dimension_semantics=("parallel", "parallel"),
            vmem_limit_bytes=vmem_limit),
        cost_estimate=pl.CostEstimate(
            flops=2 * M * Npad * D,
            transcendentals=M,                  # one rsqrt per row
            bytes_accessed=(M * D * x_item + D * Npad * ct_item
                            + Npad * 4 + M * Npad * out_item)),
    )(x2d, ct, cstat)


@functools.partial(jax.jit, static_argnames=("mode", "n"))
def _forward(x, ct, cstat, *, mode: str, n: int):
    B, L, D = x.shape
    out2d = _cluster_head_2d(x.reshape(B * L, D), ct, cstat, mode=mode)
    # slice/reshape kept in the same jit as the kernel (single dispatch).
    return out2d[:, :n].reshape(B, L, n)


# --------------------------------------------------------------------------
# Module-equivalent wrapper
# --------------------------------------------------------------------------
class MultilingualClusterHeadPallas:
    def __init__(self, lang_id2symbols: Dict[int, List], d_in: int,
                 temperature: float = 0.1, mode: str = "cos", seed: int = 0):
        if mode not in ("cos", "l2"):
            raise NotImplementedError(mode)
        self.lang_id2symbols = lang_id2symbols
        self.d_in = d_in
        self.temperature = temperature
        self.mode = mode
        self.clusters = {}      # raw (n_c, d_in) parameters (torch.randn equivalent)
        self._ct = {}           # (d_in, Npad): c.T (cos) or -2*c.T (l2), f32
        self._cstat = {}        # (1, Npad): 1/(max(||c||,eps)*T) (cos) or ||c||^2 (l2)
        self._ct_cast = {}      # memoized dtype casts of _ct
        self._n = {}
        key = jax.random.PRNGKey(seed)
        for lang_id, v in lang_id2symbols.items():
            if len(v) > 0:
                key, sk = jax.random.split(key)
                c = jax.random.normal(sk, (len(v), d_in), dtype=jnp.float32)
                self.clusters[f"head-{lang_id}"] = c
                n = len(v)
                npad = _round_up(n, 128)
                cpad = jnp.pad(c, ((0, npad - n), (0, 0)))
                c2 = jnp.sum(cpad * cpad, axis=-1, keepdims=True).T      # (1, Npad)
                if mode == "cos":
                    stat = 1.0 / (jnp.maximum(jnp.sqrt(c2), 1e-8) * temperature)
                    ct = cpad.T
                else:  # 'l2'
                    stat = c2
                    ct = -2.0 * cpad.T
                self._ct[lang_id] = jnp.asarray(ct, jnp.float32)
                self._cstat[lang_id] = jnp.asarray(stat, jnp.float32)
                self._n[lang_id] = n

    def __call__(self, x: jax.Array, lang_id: int) -> jax.Array:
        """x: (B, L, d_in) -> (B, L, n_c)."""
        B, L, D = x.shape
        assert D == self.d_in
        n = self._n[lang_id]
        key = (lang_id, jnp.dtype(x.dtype))
        ct = self._ct_cast.get(key)
        if ct is None:
            ct = self._ct[lang_id].astype(x.dtype)   # bf16 x -> bf16 MXU feed
            self._ct_cast[key] = ct
        return _forward(x, ct, self._cstat[lang_id], mode=self.mode, n=n)


# --------------------------------------------------------------------------
# Pure-JAX reference (for sanity check)
# --------------------------------------------------------------------------
def _reference(x, clusters, mode, temperature):
    y = clusters[None, None, :, :]            # (1, 1, N, D)
    xe = x[:, :, None, :]                     # (B, L, 1, D)
    if mode == "cos":
        dots = jnp.sum(y * xe, axis=3)
        denom = jnp.maximum(
            jnp.linalg.norm(y, axis=3) * jnp.linalg.norm(xe, axis=3), 1e-8)
        return dots / denom / temperature
    else:
        return -jnp.linalg.norm(y - xe, axis=3)


if __name__ == "__main__":
    # Small, deterministic example.
    B, L, d_in = 2, 8, 32
    lang_id2symbols = {0: list(range(16)), 1: list(range(12)), 2: []}

    head_cos = MultilingualClusterHeadPallas(lang_id2symbols, d_in,
                                             temperature=0.1, mode="cos")
    head_l2 = MultilingualClusterHeadPallas(lang_id2symbols, d_in,
                                            temperature=0.1, mode="l2")

    key = jax.random.PRNGKey(0)
    x = jax.random.normal(key, (B, L, d_in), dtype=jnp.float32)

    ok = True
    for lang_id in (0, 1):
        out_cos = jax.block_until_ready(head_cos(x, lang_id))
        out_l2 = jax.block_until_ready(head_l2(x, lang_id))
        c_cos = head_cos.clusters[f"head-{lang_id}"]
        c_l2 = head_l2.clusters[f"head-{lang_id}"]
        ref_cos = _reference(x, c_cos, "cos", 0.1)
        ref_l2 = _reference(x, c_l2, "l2", 0.1)
        ok &= bool(jnp.allclose(out_cos, ref_cos, atol=5e-3, rtol=5e-3))
        ok &= bool(jnp.allclose(out_l2, ref_l2, atol=1e-3, rtol=1e-3))
        n_c = len(lang_id2symbols[lang_id])
        assert out_cos.shape == (B, L, n_c)
        assert out_l2.shape == (B, L, n_c)

    if ok:
        print("KERNEL_OK")
    else:
        raise SystemExit("mismatch vs reference")
</pallas_src>

<mosaic_0001>
module attributes {stable_mosaic.version = 11 : i64} {
  func.func @_cos_kernel(%arg0: i32, %arg1: i32, %arg2: memref<16x32xf32, #tpu.memory_space<vmem>>, %arg3: memref<32x128xf32, #tpu.memory_space<vmem>>, %arg4: memref<1x128xf32, #tpu.memory_space<vmem>>, %arg5: memref<16x128xf32, #tpu.memory_space<vmem>>) attributes {dimension_semantics = [#tpu.dimension_semantics<parallel>, #tpu.dimension_semantics<parallel>], iteration_bounds = array<i64: 1, 1>, scalar_prefetch = 0 : i64, scratch_operands = 0 : i64, tpu.core_type = #tpu.core_type<tc>, window_params = [{transform_indices = @transform_0, window_bounds = array<i64: 16, 32>}, {transform_indices = @transform_1, window_bounds = array<i64: 32, 128>}, {transform_indices = @transform_2, window_bounds = array<i64: 1, 128>}, {transform_indices = @transform_3, window_bounds = array<i64: 16, 128>}]} {
    %c0 = arith.constant 0 : index
    %c0_0 = arith.constant 0 : index
    %0 = vector.load %arg2[%c0, %c0_0] : memref<16x32xf32, #tpu.memory_space<vmem>>, vector<16x32xf32>
    %c0_1 = arith.constant 0 : index
    %c0_2 = arith.constant 0 : index
    %1 = vector.load %arg3[%c0_1, %c0_2] : memref<32x128xf32, #tpu.memory_space<vmem>>, vector<32x128xf32>
    %cst = arith.constant dense<0.000000e+00> : vector<16x128xf32>
    %2 = tpu.matmul %0, %1, %cst {dimension_numbers = #tpu.dot_dimension_numbers<[1], [0], [0], [1], [0, 0, 1, 1], [], []>} : vector<16x32xf32>, vector<32x128xf32>, vector<16x128xf32> -> vector<16x128xf32>
    %3 = arith.mulf %0, %0 : vector<16x32xf32>
    %cst_3 = arith.constant dense<0.000000e+00> : vector<16xf32>
    %4 = vector.multi_reduction <add>, %3, %cst_3 [1] : vector<16x32xf32> to vector<16xf32>
    %5 = vector.shape_cast %4 : vector<16xf32> to vector<16x1xf32>
    %cst_4 = arith.constant 1.000000e-16 : f32
    %6 = vector.broadcast %cst_4 : f32 to vector<16x1xf32>
    %7 = arith.maximumf %5, %6 : vector<16x1xf32>
    %8 = math.rsqrt %7 : vector<16x1xf32>
    %9 = vector.broadcast %8 : vector<16x1xf32> to vector<16x128xf32>
    %10 = arith.mulf %2, %9 : vector<16x128xf32>
    %c0_5 = arith.constant 0 : index
    %c0_6 = arith.constant 0 : index
    %11 = vector.load %arg4[%c0_5, %c0_6] : memref<1x128xf32, #tpu.memory_space<vmem>>, vector<1x128xf32>
    %12 = vector.broadcast %11 : vector<1x128xf32> to vector<16x128xf32>
    %13 = arith.mulf %10, %12 : vector<16x128xf32>
    %c0_7 = arith.constant 0 : index
    %c0_8 = arith.constant 0 : index
    %14 = vector.load %arg5[%c0_7, %c0_8] : memref<16x128xf32, #tpu.memory_space<vmem>>, vector<16x128xf32>
    tpu.vector_store %arg5[%c0_7, %c0_8], %13 {strides = array<i32>} : memref<16x128xf32, #tpu.memory_space<vmem>>, vector<16x128xf32>,
    return
  }
  func.func @transform_0(%arg0: i32, %arg1: i32) -> (i32, i32) {
    %c0_i32 = arith.constant 0 : i32
    %c0_i32_0 = arith.constant 0 : i32
    return %arg0, %c0_i32 : i32, i32
  }
  func.func @transform_1(%arg0: i32, %arg1: i32) -> (i32, i32) {
    %c0_i32 = arith.constant 0 : i32
    %c0_i32_0 = arith.constant 0 : i32
    return %c0_i32, %arg1 : i32, i32
  }
  func.func @transform_2(%arg0: i32, %arg1: i32) -> (i32, i32) {
    %c0_i32 = arith.constant 0 : i32
    %c0_i32_0 = arith.constant 0 : i32
    return %c0_i32, %arg1 : i32, i32
  }
  func.func @transform_3(%arg0: i32, %arg1: i32) -> (i32, i32) {
    %c0_i32 = arith.constant 0 : i32
    return %arg0, %arg1 : i32, i32
  }
}

</mosaic_0001>

<llo_original>
// kernel: _forward.1
$region0: #{_forward.1}
  #allocation0 [shape = 'u32[]', space=smem, size = 0x4, offset = 0x4, fixed_abs, tag = 'smem constant byte address 0x4 - core index']
  #allocation1 [shape = 'u32[144,128]{1,0:T(1,128)}', space=vmem, size = 0x12000, scoped, tag = 'internal scratch']
  %s0 = inlined_call_operand.hbm [shape: f32[16,32], index: 0, kind: input, shape index: {}]
  %s1 = inlined_call_operand.hbm [shape: f32[32,128], index: 1, kind: input, shape index: {}]
  %s2 = inlined_call_operand.vmem [shape: f32[1,128], index: 2, kind: input, shape index: {}]
  %s3 = inlined_call_operand.vmem [shape: f32[16,128], index: 3, kind: output, shape index: {}]
  %s4 = sld [smem:[#allocation0]]
  $region30: #{_forward.1} parent=0
    _
  %s6 = ssub.s32 1, %s4
  %s7 = scalar_select 0, %s6, %s4
  $region1: #{_forward.1} parent=0
    #allocation2 [shape = 'u8[8192]{0}', space=vmem, size = 0x2000, scoped, tag = 'input window, operand 0, single buffered']
    #allocation3 [shape = 's32[1]{0}', space=sflag, size = 0x4, scoped, tag = 'scoped memory for _forward.1']
    #allocation4 [shape = 'u8[16384]{0}', space=vmem, size = 0x4000, scoped, tag = 'input window, operand 1, single buffered']
    #allocation5 [shape = 's32[1]{0}', space=sflag, size = 0x4, scoped, tag = 'scoped memory for _forward.1']
    %8 = vsyncpa [#allocation3], 0
    %9 = vsyncpa [#allocation5], 0
    // Predicated region
    $region2: #{_forward.1} parent=1 // pred_check
      _
    $region3: #{_forward.1} parent=1 // pred_check_branch
      %11 = sbr.rel (0) target = $region5
    $region4: #{_forward.1} parent=1 // pred_region
      %s13 = ssub.s32 256, 256
      %14 = vsyncadd [#allocation3], %s13
      %s15 = sshll.u32 [#allocation2], 4
      %s16 = int_to_ptr.vmem [resolvable:$true] %s15
      %21 = dma.hbm_to_vmem [thread:$0]  %s0, 256, %s16, [#allocation3], 128, 128, 8
    $region5: #{_forward.1} parent=1 // pred_fallthru
      _
    // Predicated region
    $region6: #{_forward.1} parent=1 // pred_check
      _
    $region7: #{_forward.1} parent=1 // pred_check_branch
      %23 = sbr.rel (0) target = $region9
    $region8: #{_forward.1} parent=1 // pred_region
      %s25 = ssub.s32 512, 512
      %26 = vsyncadd [#allocation5], %s25
      %s27 = sshll.u32 [#allocation4], 4
      %s28 = int_to_ptr.vmem [resolvable:$true] %s27
      %33 = dma.hbm_to_vmem [thread:$0]  %s1, 512, %s28, [#allocation5], 128, 128, 8
    $region9: #{_forward.1} parent=1 // pred_fallthru
      _
    // Predicated region
    $region10: #{_forward.1} parent=1 // pred_check
      _
    $region11: #{_forward.1} parent=1 // pred_check_branch
      %35 = sbr.rel (0) target = $region13
    $region12: #{_forward.1} parent=1 // pred_region
      _
    $region13: #{_forward.1} parent=1 // pred_fallthru
      _
    // Predicated region
    $region14: #{_forward.1} parent=1 // pred_check
      _
    $region15: #{_forward.1} parent=1 // pred_check_branch
      %37 = sbr.rel (0) target = $region17
    $region16: #{_forward.1} parent=1 // pred_region
      %38 = dma.done [#allocation3], 256
    $region17: #{_forward.1} parent=1 // pred_fallthru
      _
    // Predicated region
    $region18: #{_forward.1} parent=1 // pred_check
      _
    $region19: #{_forward.1} parent=1 // pred_check_branch
      %40 = sbr.rel (0) target = $region21
    $region20: #{_forward.1} parent=1 // pred_region
      %41 = dma.done [#allocation5], 512
    $region21: #{_forward.1} parent=1 // pred_fallthru
      _
    %v42 = vld [vmem:[#allocation2] sm:$0xff]
    %v43 = vld [vmem:[#allocation2 + $0x8] sm:$0xff]
    %v44 = vld [vmem:[#allocation4] sm:$0xff]
    %v45 = vld [vmem:[#allocation4 + $0x8] sm:$0xff]
    %v46 = vld [vmem:[#allocation4 + $0x10] sm:$0xff]
    %v47 = vld [vmem:[#allocation4 + $0x18] sm:$0xff]
    %vm48 = vcmask 261120
    %v50 = vsel %vm48, %v42, 0
    %v53 = vsel %vm48, %v43, 0
    %55 = vmatprep.subr.mxu0 0.0
    %56 = vmatpush1.msra.mxu0 %v44
    %57 = vmatprep.subr.mxu0 0.0
    %58 = vmatpush1.msra.mxu0 %v45
    %59 = vmatprep.subr.mxu0 0.0
    %60 = vmatpush1.msra.mxu0 %v46
    %61 = vmatprep.subr.mxu0 0.0
    %62 = vmatpush1.msra.mxu0 %v47
    %63 = vmatprep.subr.mxu0 0.0
    %64 = vmatpush1.msra.mxu0 0.0
    %65 = vmatprep.subr.mxu0 0.0
    %66 = vmatpush1.msra.mxu0 0.0
    %67 = vmatprep.subr.mxu0 0.0
    %68 = vmatpush1.msra.mxu0 0.0
    %69 = vmatprep.subr.mxu0 0.0
    %70 = vmatpush1.msra.mxu0 0.0
    %71 = vmatprep.subr.mxu0 0.0
    %72 = vmatpush1.msra.mxu0 0.0
    %73 = vmatprep.subr.mxu0 0.0
    %74 = vmatpush1.msra.mxu0 0.0
    %75 = vmatprep.subr.mxu0 0.0
    %76 = vmatpush1.msra.mxu0 0.0
    %77 = vmatprep.subr.mxu0 0.0
    %78 = vmatpush1.msra.mxu0 0.0
    %79 = vmatprep.subr.mxu0 0.0
    %80 = vmatpush1.msra.mxu0 0.0
    %81 = vmatprep.subr.mxu0 0.0
    %82 = vmatpush1.msra.mxu0 0.0
    %83 = vmatprep.subr.mxu0 0.0
    %84 = vmatpush1.msra.mxu0 0.0
    %85 = vmatprep.subr.mxu0 0.0
    %86 = vmatpush1.msra.mxu0 0.0
    %87 = vmatprep.subr.mxu0 0.0
    %88 = vmatpush1.msra.mxu0 0.0
    %89 = vmatprep.subr.mxu0 0.0
    %90 = vmatpush1.msra.mxu0 0.0
    %91 = vmatprep.subr.mxu0 0.0
    %92 = vmatpush1.msra.mxu0 0.0
    %93 = vmatprep.subr.mxu0 0.0
    %94 = vmatpush1.msra.mxu0 0.0
    %95 = vmatprep.subr.mxu0 0.0
    %96 = vmatpush1.msra.mxu0 0.0
    %97 = vmatprep.subr.mxu0 0.0
    %98 = vmatpush1.msra.mxu0 0.0
    %99 = vmatprep.subr.mxu0 0.0
    %100 = vmatpush1.msra.mxu0 0.0
    %101 = vmatprep.subr.mxu0 0.0
    %102 = vmatpush1.msra.mxu0 0.0
    %103 = vmatprep.subr.mxu0 0.0
    %104 = vmatpush1.msra.mxu0 0.0
    %105 = vmatprep.subr.mxu0 0.0
    %106 = vmatpush1.msra.mxu0 0.0
    %107 = vmatprep.subr.mxu0 0.0
    %108 = vmatpush1.msra.mxu0 0.0
    %109 = vmatprep.subr.mxu0 0.0
    %110 = vmatpush1.msra.mxu0 0.0
    %111 = vmatprep.subr.mxu0 0.0
    %112 = vmatpush1.msra.mxu0 0.0
    %113 = vmatprep.subr.mxu0 0.0
    %114 = vmatpush1.msra.mxu0 0.0
    %115 = vmatprep.subr.mxu0 0.0
    %116 = vmatpush1.msra.mxu0 0.0
    %117 = vmatprep.subr.mxu0 0.0
    %118 = vmatpush1.msra.mxu0 0.0
    %119 = vmatprep.mubr.f32.mxu0 0.0
    %120 = vmatmul.mubr.f32.gmra.mrb[0].mxu0 %v50
    %v121 = vpop.f32.mrb[0].mxu0
    %v122 = vadd.f32 0.0, %v121
    %v123 = vpop.f32.mrb[0].mxu0
    %124 = vmatprep.mubr.f32.mxu0 0.0
    %125 = vmatmul.mubr.f32.gmra.mrb[0].mxu0 %v53
    %v126 = vpop.f32.mrb[0].mxu0
    %v127 = vadd.f32 0.0, %v126
    %v128 = vpop.f32.mrb[0].mxu0
    %129 = vdwg.mxu0
    %v130 = vmul.f32 %v42, %v42
    %v131 = vmul.f32 %v43, %v43
    %v132 = vsel %vm48, %v130, 0.0
    %133 = vadd.xlane.f32.xlu0 %v132
    %v134 = vpop.xlane.xlu0 %133
    %v135 = vsel %vm48, %v131, 0.0
    %136 = vadd.xlane.f32.xlu0 %v135
    %v137 = vpop.xlane.xlu0 %136
    %v138 = vmax.f32 %v134, 1e-16
    %v139 = vmax.f32 %v137, 1e-16
    %v140 = vrsqrt.pop %v138
    %v141 = vrsqrt.pop %v139
    %v142 = vmul.f32 %v122, %v140
    %v143 = vmul.f32 %v127, %v141
    %v144 = vld [vmem:[%s2] sm:$0x1]
    %v146 = vlaneseq
    %v147 = vshrl.u32 %v146, 7
    %v148 = vsub.s32 0, %v147
    %v149 = vrot.slane %v144, %v148
    %v151 = vmul.f32 %v142, %v149
    %v152 = vmul.f32 %v143, %v149
    %153 = vst [vmem:[%s3] sm:$0xff] %v151
    %154 = vst [vmem:[%s3 + $0x8] sm:$0xff] %v152
    // Predicated region
    $region22: #{_forward.1} parent=1 // pred_check
      _
    $region23: #{_forward.1} parent=1 // pred_check_branch
      %156 = sbr.rel (0) target = $region25
    $region24: #{_forward.1} parent=1 // pred_region
      _
    $region25: #{_forward.1} parent=1 // pred_fallthru
      _
    // Predicated region
    $region26: #{_forward.1} parent=1 // pred_check
      _
    $region27: #{_forward.1} parent=1 // pred_check_branch
      %158 = sbr.rel (0) target = $region29
    $region28: #{_forward.1} parent=1 // pred_region
      _
    $region29: #{_forward.1} parent=1 // pred_fallthru
      _
    %159 = vsyncpa [#allocation3], 1
    %160 = vsyncpa [#allocation5], 1

</llo_original>
